<compile_context>
chip_gen: v7x
topology: tpu7x:2x2x1
jax: 0.10.0
libtpu: 0.0.40
codegen_flags: <defaults>
</compile_context>

<pallas_src>
import functools

import numpy as np
import jax
import jax.numpy as jnp
from jax import lax
from jax.experimental import pallas as pl
from jax.experimental.pallas import tpu as pltpu


def _round_up(x, m):
    return ((x + m - 1) // m) * m


# ---------------------------------------------------------------------------
# Kernel 1: conv1d -> relu -> linear(D->1) -> sigmoid -> relu -> * mask
# One grid step handles one (batch, time-block) tile of TB output frames.
# ---------------------------------------------------------------------------
def _alpha_kernel(hid_ref, halo_ref, convw_ref, convb_ref, linw_ref, linb_ref,
                  mask_ref, alpha_ref, win_ref, *, TB, D, K, l_order, r_order,
                  L0, smooth_factor, noise_threshold):
    # Assemble the conv window (left halo | hidden block | right halo) in a
    # bf16 VMEM scratch; the big TB-row store lands on an aligned offset L0.
    if l_order > 0:
        win_ref[L0 - l_order:L0, :] = \
            halo_ref[0, 0, 0:l_order, :].astype(jnp.bfloat16)
    win_ref[L0:L0 + TB, :] = hid_ref[0].astype(jnp.bfloat16)
    if r_order > 0:
        win_ref[L0 + TB:L0 + TB + r_order, :] = \
            halo_ref[0, 0, l_order:l_order + r_order, :].astype(jnp.bfloat16)

    # Conv1d (D -> D, kernel K) as K shifted bf16 MXU matmuls, f32 accumulate.
    base = L0 - l_order
    acc = jnp.zeros((TB, D), jnp.float32)
    for k in range(K):
        acc = acc + jnp.dot(win_ref[base + k:base + k + TB, :], convw_ref[k],
                            preferred_element_type=jnp.float32)
    conv_out = jnp.maximum(acc + convb_ref[...], 0.0)                 # relu

    # cif_output Linear(D, 1) as a lane (XLU) reduction; epilogue stays f32.
    logits = jnp.sum(conv_out * linw_ref[...], axis=-1, keepdims=True) \
        + linb_ref[...]
    a = jax.nn.sigmoid(logits)
    a = jnp.maximum(a * smooth_factor - noise_threshold, 0.0)
    alpha_ref[0] = a * mask_ref[0]                                    # (TB, 1)


# ---------------------------------------------------------------------------
# Kernel 2: sequential CIF integrate-and-fire scan over time, vectorized over
# batch.  Grid = (batch groups [parallel], time chunks [arbitrary]); the
# integrate / frame state lives in VMEM scratch across time chunks.
# ---------------------------------------------------------------------------
def _cif_scan_kernel(hid_ref, a_ref, frames_ref, fires_ref, int_sc, frm_sc,
                     *, TC, threshold):
    @pl.when(pl.program_id(1) == 0)
    def _init():
        int_sc[...] = jnp.zeros_like(int_sc)
        frm_sc[...] = jnp.zeros_like(frm_sc)

    def step(t, carry):
        integrate, frame = carry                     # (Bg, 1), (Bg, D) f32
        alpha = a_ref[t]                             # (Bg, 1)
        distribution_completion = 1.0 - integrate
        integrate = integrate + alpha
        fires_ref[t] = integrate                     # recorded before reset
        fire = integrate >= threshold
        cur = jnp.where(fire, distribution_completion, alpha)
        remainds = alpha - cur
        h = hid_ref[t]                               # (Bg, D)
        frame = frame + cur * h
        frames_ref[t] = frame                        # recorded before reset
        frame = jnp.where(fire, remainds * h, frame)
        integrate = jnp.where(fire, integrate - 1.0, integrate)
        return integrate, frame

    integrate, frame = lax.fori_loop(0, TC, step, (int_sc[...], frm_sc[...]),
                                     unroll=8)
    int_sc[...] = integrate
    frm_sc[...] = frame


# ---------------------------------------------------------------------------
# Wrapper: CifPredictorV2.forward (target_label=None, tail_threshold=0.0 path)
# ---------------------------------------------------------------------------
def cif_predictor_v2_forward(hidden, mask, params, *, l_order, r_order,
                             threshold, smooth_factor, noise_threshold):
    B, T, D = hidden.shape
    K = l_order + r_order + 1

    # ------------------- kernel 1: alphas --------------------------------- #
    if T >= 2048:
        tb_target = 512
    elif T >= 512:
        tb_target = 256
    else:
        tb_target = 128
    TB = min(tb_target, _round_up(T, 16))     # sublane-tiling friendly
    Tp1 = _round_up(T, TB)
    NT1 = Tp1 // TB

    hid_f = hidden.astype(jnp.float32)
    if Tp1 > T:
        hid_f = jnp.pad(hid_f, ((0, 0), (0, Tp1 - T), (0, 0)))

    # Tiny per-block halo rows instead of a full ConstantPad1d copy of hidden.
    HALO = max(K - 1, 1)
    if K > 1:
        offs = np.concatenate([np.arange(-l_order, 0),
                               TB + np.arange(r_order)]).astype(np.int32)
        starts = np.arange(NT1, dtype=np.int32) * TB
        idx = starts[:, None] + offs[None, :]                    # (NT1, K-1)
        valid = jnp.asarray((idx >= 0) & (idx < T))
        idx_c = jnp.asarray(np.clip(idx, 0, T - 1))
        halo = jnp.where(valid[None, :, :, None],
                         hidden[:, idx_c, :], 0.0).astype(jnp.float32)
    else:
        halo = jnp.zeros((B, NT1, HALO, D), jnp.float32)

    # torch mask is (B, 1, T); transpose(-1,-2) -> (B, T, 1)
    mask2d = mask[:, 0, :].astype(jnp.float32)
    if Tp1 > T:
        mask2d = jnp.pad(mask2d, ((0, 0), (0, Tp1 - T)))
    mask3 = mask2d[:, :, None]                                   # (B, Tp1, 1)

    conv_w = params["conv_w"].astype(jnp.bfloat16)               # (K, D, D)
    conv_b = params["conv_b"].astype(jnp.float32)                # (1, D)
    lin_w = params["lin_w"].astype(jnp.float32)                  # (1, D)
    lin_b = params["lin_b"].reshape(1, 1).astype(jnp.float32)    # (1, 1)

    L0 = _round_up(l_order, 16) if l_order > 0 else 0

    alphas3 = pl.pallas_call(
        functools.partial(_alpha_kernel, TB=TB, D=D, K=K, l_order=l_order,
                          r_order=r_order, L0=L0,
                          smooth_factor=float(smooth_factor),
                          noise_threshold=float(noise_threshold)),
        grid=(B, NT1),
        out_shape=jax.ShapeDtypeStruct((B, Tp1, 1), jnp.float32),
        in_specs=[
            pl.BlockSpec((1, TB, D), lambda b, t: (b, t, 0)),          # hidden
            pl.BlockSpec((1, 1, HALO, D), lambda b, t: (b, t, 0, 0)),  # halos
            pl.BlockSpec((K, D, D), lambda b, t: (0, 0, 0)),           # conv_w
            pl.BlockSpec((1, D), lambda b, t: (0, 0)),                 # conv_b
            pl.BlockSpec((1, D), lambda b, t: (0, 0)),                 # lin_w
            pl.BlockSpec((1, 1), lambda b, t: (0, 0)),                 # lin_b
            pl.BlockSpec((1, TB, 1), lambda b, t: (b, t, 0)),          # mask
        ],
        out_specs=pl.BlockSpec((1, TB, 1), lambda b, t: (b, t, 0)),
        scratch_shapes=[pltpu.VMEM((L0 + TB + r_order, D), jnp.bfloat16)],
        compiler_params=pltpu.CompilerParams(
            dimension_semantics=("parallel", "parallel")),
    )(hid_f, halo, conv_w, conv_b, lin_w, lin_b, mask3)

    alphas = alphas3[:, :T, 0]                                   # (B, T)
    token_num = jnp.sum(alphas, axis=-1)

    # ------------------- kernel 2: CIF scan ------------------------------- #
    # Time-chunk size: as large as a ~2 MiB (TC, B, D) f32 block allows,
    # capped at 128, multiple of 8.
    tc_cap = max(8, ((2 << 20) // max(1, B * D * 4)) // 8 * 8)
    TC = max(8, min(128, tc_cap, _round_up(T, 8)))
    Tp2 = _round_up(T, TC)
    NT2 = Tp2 // TC

    if B % 16 == 0:                  # split batch into 2 groups (v7x 2-TC)
        Bg, NBG = B // 2, 2
    else:
        Bg, NBG = B, 1

    # (T, B, D) layout so each scan step reads one contiguous (Bg, D) tile.
    # TODO(synk): this transpose (and the frames transpose back) could be
    # fused into the kernels, but a wrapper-side XLA transpose is kept for
    # robustness of the sublane-relayout.
    hidden_tbd = jnp.transpose(hidden.astype(jnp.float32), (1, 0, 2))  # (T,B,D)
    if Tp2 > T:
        hidden_tbd = jnp.pad(hidden_tbd, ((0, Tp2 - T), (0, 0), (0, 0)))
    alphas_tb1 = jnp.transpose(alphas, (1, 0))[:, :, None]             # (T,B,1)
    if Tp2 > T:
        alphas_tb1 = jnp.pad(alphas_tb1, ((0, Tp2 - T), (0, 0), (0, 0)))

    frames_tbd, fires_tb1 = pl.pallas_call(
        functools.partial(_cif_scan_kernel, TC=TC, threshold=float(threshold)),
        grid=(NBG, NT2),
        out_shape=(jax.ShapeDtypeStruct((Tp2, B, D), jnp.float32),
                   jax.ShapeDtypeStruct((Tp2, B, 1), jnp.float32)),
        in_specs=[
            pl.BlockSpec((TC, Bg, D), lambda g, t: (t, g, 0)),    # hidden
            pl.BlockSpec((TC, Bg, 1), lambda g, t: (t, g, 0)),    # alphas
        ],
        out_specs=(
            pl.BlockSpec((TC, Bg, D), lambda g, t: (t, g, 0)),    # frames
            pl.BlockSpec((TC, Bg, 1), lambda g, t: (t, g, 0)),    # fires
        ),
        scratch_shapes=[pltpu.VMEM((Bg, 1), jnp.float32),         # integrate
                        pltpu.VMEM((Bg, D), jnp.float32)],        # frame
        compiler_params=pltpu.CompilerParams(
            dimension_semantics=("parallel", "arbitrary")),
    )(hidden_tbd, alphas_tb1)

    frames = jnp.transpose(frames_tbd[:T], (1, 0, 2))             # (B, T, D)
    fires = jnp.transpose(fires_tb1[:T, :, 0], (1, 0))            # (B, T)

    return alphas, token_num, frames, fires


def _gather_acoustic_embeds(frames, fires, alphas, threshold):
    # TODO(synk): the fired-frame gather/pad has a data-dependent output length
    # (max_label_len = round(alphas.sum(-1)).max()), so it runs on host with
    # concrete values (glue, not the hot path).
    frames = np.asarray(frames)
    fires = np.asarray(fires)
    alphas = np.asarray(alphas)
    B, T, D = frames.shape
    len_labels = np.rint(alphas.sum(-1)).astype(np.int32)   # torch.round: half-to-even
    max_label_len = int(len_labels.max())
    outs = []
    for b in range(B):
        idx = np.nonzero(fires[b] >= threshold)[0]
        l = frames[b][idx][:max_label_len]
        pad_l = np.zeros((max(0, max_label_len - l.shape[0]), D), np.float32)
        outs.append(np.concatenate([l, pad_l], axis=0))
    return np.stack(outs, axis=0)


if __name__ == "__main__":
    # CifPredictorV2(idim=128, l_order=1, r_order=1, threshold=1.0,
    #                smooth_factor=1.0, noise_threshold=0.0, tail_threshold=0.0)
    B, T, D = 2, 16, 128
    L_ORDER, R_ORDER = 1, 1
    K = L_ORDER + R_ORDER + 1
    THRESHOLD = 1.0
    SMOOTH_FACTOR = 1.0
    NOISE_THRESHOLD = 0.0

    key = jax.random.PRNGKey(0)
    k1, k2, k3, k4 = jax.random.split(key, 4)

    params = {
        # conv_w[k] = torch_conv_weight[:, :, k].T  (deterministic synthetic init)
        "conv_w": (jax.random.normal(k1, (K, D, D), jnp.float32)
                   * (1.0 / np.sqrt(D * K))).astype(jnp.float32),
        "conv_b": (jax.random.normal(k2, (1, D), jnp.float32) * 0.05).astype(jnp.float32),
        # lin_w = torch_linear_weight (shape (1, D)); lin_b scalar
        "lin_w": (jax.random.normal(k3, (1, D), jnp.float32)
                  * (1.0 / np.sqrt(D))).astype(jnp.float32),
        "lin_b": jnp.zeros((1, 1), jnp.float32),
    }

    hidden = jax.random.normal(k4, (B, T, D), jnp.float32)
    lengths = jnp.array([T, T - 3], jnp.int32)
    # torch-style attention mask of shape (B, 1, T)
    mask = (jnp.arange(T)[None, :] < lengths[:, None]).astype(jnp.float32)[:, None, :]

    alphas, token_num, frames, fires = cif_predictor_v2_forward(
        hidden, mask, params,
        l_order=L_ORDER, r_order=R_ORDER, threshold=THRESHOLD,
        smooth_factor=SMOOTH_FACTOR, noise_threshold=NOISE_THRESHOLD)

    jax.block_until_ready((alphas, token_num, frames, fires))

    acoustic_embeds = _gather_acoustic_embeds(frames, fires, alphas, THRESHOLD)
    cif_peak = fires

    # Forward returns (acoustic_embeds, token_num, alphas, cif_peak).
    assert alphas.shape == (B, T)
    assert token_num.shape == (B,)
    assert cif_peak.shape == (B, T)
    assert acoustic_embeds.ndim == 3 and acoustic_embeds.shape[0] == B \
        and acoustic_embeds.shape[2] == D

    print("KERNEL_OK")
</pallas_src>

<mosaic_0001>
module attributes {stable_mosaic.version = 11 : i64} {
  func.func @_alpha_kernel(%arg0: i32, %arg1: i32, %arg2: memref<1x16x128xf32, #tpu.memory_space<vmem>>, %arg3: memref<1x1x2x128xf32, #tpu.memory_space<vmem>>, %arg4: memref<3x128x128xbf16, #tpu.memory_space<vmem>>, %arg5: memref<1x128xf32, #tpu.memory_space<vmem>>, %arg6: memref<1x128xf32, #tpu.memory_space<vmem>>, %arg7: memref<1x1xf32, #tpu.memory_space<vmem>>, %arg8: memref<1x16x1xf32, #tpu.memory_space<vmem>>, %arg9: memref<1x16x1xf32, #tpu.memory_space<vmem>>, %arg10: memref<33x128xbf16, #tpu.memory_space<vmem>>) attributes {dimension_semantics = [#tpu.dimension_semantics<parallel>, #tpu.dimension_semantics<parallel>], iteration_bounds = array<i64: 2, 1>, scalar_prefetch = 0 : i64, scratch_operands = 1 : i64, tpu.core_type = #tpu.core_type<tc>, window_params = [{transform_indices = @transform_0, window_bounds = array<i64: 1, 16, 128>}, {transform_indices = @transform_1, window_bounds = array<i64: 1, 1, 2, 128>}, {pipeline_mode = #tpu.pipeline_mode<synchronous>, transform_indices = @transform_2, window_bounds = array<i64: 3, 128, 128>}, {pipeline_mode = #tpu.pipeline_mode<synchronous>, transform_indices = @transform_3, window_bounds = array<i64: 1, 128>}, {pipeline_mode = #tpu.pipeline_mode<synchronous>, transform_indices = @transform_4, window_bounds = array<i64: 1, 128>}, {pipeline_mode = #tpu.pipeline_mode<synchronous>, transform_indices = @transform_5, window_bounds = array<i64: 1, 1>}, {transform_indices = @transform_6, window_bounds = array<i64: 1, 16, 1>}, {transform_indices = @transform_7, window_bounds = array<i64: 1, 16, 1>}]} {
    %c0 = arith.constant 0 : index
    %c0_0 = arith.constant 0 : index
    %c0_1 = arith.constant 0 : index
    %c0_2 = arith.constant 0 : index
    %0 = vector.load %arg3[%c0, %c0_0, %c0_1, %c0_2] : memref<1x1x2x128xf32, #tpu.memory_space<vmem>>, vector<1x1x1x128xf32>
    %1 = vector.shape_cast %0 : vector<1x1x1x128xf32> to vector<1x128xf32>
    %2 = arith.truncf %1 : vector<1x128xf32> to vector<1x128xbf16>
    %c15 = arith.constant 15 : index
    %c0_3 = arith.constant 0 : index
    %3 = vector.load %arg10[%c15, %c0_3] : memref<33x128xbf16, #tpu.memory_space<vmem>>, vector<1x128xbf16>
    tpu.vector_store %arg10[%c15, %c0_3], %2 {strides = array<i32>} : memref<33x128xbf16, #tpu.memory_space<vmem>>, vector<1x128xbf16>,
    %c0_4 = arith.constant 0 : index
    %c0_5 = arith.constant 0 : index
    %c0_6 = arith.constant 0 : index
    %4 = vector.load %arg2[%c0_4, %c0_5, %c0_6] : memref<1x16x128xf32, #tpu.memory_space<vmem>>, vector<1x16x128xf32>
    %5 = vector.shape_cast %4 : vector<1x16x128xf32> to vector<16x128xf32>
    %6 = arith.truncf %5 : vector<16x128xf32> to vector<16x128xbf16>
    %c16 = arith.constant 16 : index
    %c0_7 = arith.constant 0 : index
    %7 = vector.load %arg10[%c16, %c0_7] : memref<33x128xbf16, #tpu.memory_space<vmem>>, vector<16x128xbf16>
    tpu.vector_store %arg10[%c16, %c0_7], %6 {strides = array<i32>} : memref<33x128xbf16, #tpu.memory_space<vmem>>, vector<16x128xbf16>,
    %c0_8 = arith.constant 0 : index
    %c0_9 = arith.constant 0 : index
    %c1 = arith.constant 1 : index
    %c0_10 = arith.constant 0 : index
    %8 = vector.load %arg3[%c0_8, %c0_9, %c1, %c0_10] : memref<1x1x2x128xf32, #tpu.memory_space<vmem>>, vector<1x1x1x128xf32>
    %9 = vector.shape_cast %8 : vector<1x1x1x128xf32> to vector<1x128xf32>
    %10 = arith.truncf %9 : vector<1x128xf32> to vector<1x128xbf16>
    %c32 = arith.constant 32 : index
    %c0_11 = arith.constant 0 : index
    %11 = vector.load %arg10[%c32, %c0_11] : memref<33x128xbf16, #tpu.memory_space<vmem>>, vector<1x128xbf16>
    tpu.vector_store %arg10[%c32, %c0_11], %10 {strides = array<i32>} : memref<33x128xbf16, #tpu.memory_space<vmem>>, vector<1x128xbf16>,
    %cst = arith.constant 0.000000e+00 : f32
    %12 = vector.broadcast %cst : f32 to vector<16x128xf32>
    %c15_12 = arith.constant 15 : index
    %c0_13 = arith.constant 0 : index
    %13 = vector.load %arg10[%c15_12, %c0_13] : memref<33x128xbf16, #tpu.memory_space<vmem>>, vector<16x128xbf16>
    %c0_14 = arith.constant 0 : index
    %c0_15 = arith.constant 0 : index
    %c0_16 = arith.constant 0 : index
    %14 = vector.load %arg4[%c0_14, %c0_15, %c0_16] : memref<3x128x128xbf16, #tpu.memory_space<vmem>>, vector<1x128x128xbf16>
    %15 = vector.shape_cast %14 : vector<1x128x128xbf16> to vector<128x128xbf16>
    %cst_17 = arith.constant dense<0.000000e+00> : vector<16x128xf32>
    %16 = tpu.matmul %13, %15, %cst_17 {dimension_numbers = #tpu.dot_dimension_numbers<[1], [0], [0], [1], [0, 0, 1, 1], [], []>} : vector<16x128xbf16>, vector<128x128xbf16>, vector<16x128xf32> -> vector<16x128xf32>
    %17 = arith.addf %12, %16 : vector<16x128xf32>
    %c16_18 = arith.constant 16 : index
    %c0_19 = arith.constant 0 : index
    %18 = vector.load %arg10[%c16_18, %c0_19] : memref<33x128xbf16, #tpu.memory_space<vmem>>, vector<16x128xbf16>
    %c1_20 = arith.constant 1 : index
    %c0_21 = arith.constant 0 : index
    %c0_22 = arith.constant 0 : index
    %19 = vector.load %arg4[%c1_20, %c0_21, %c0_22] : memref<3x128x128xbf16, #tpu.memory_space<vmem>>, vector<1x128x128xbf16>
    %20 = vector.shape_cast %19 : vector<1x128x128xbf16> to vector<128x128xbf16>
    %cst_23 = arith.constant dense<0.000000e+00> : vector<16x128xf32>
    %21 = tpu.matmul %18, %20, %cst_23 {dimension_numbers = #tpu.dot_dimension_numbers<[1], [0], [0], [1], [0, 0, 1, 1], [], []>} : vector<16x128xbf16>, vector<128x128xbf16>, vector<16x128xf32> -> vector<16x128xf32>
    %22 = arith.addf %17, %21 : vector<16x128xf32>
    %c17 = arith.constant 17 : index
    %c0_24 = arith.constant 0 : index
    %23 = vector.load %arg10[%c17, %c0_24] : memref<33x128xbf16, #tpu.memory_space<vmem>>, vector<16x128xbf16>
    %c2 = arith.constant 2 : index
    %c0_25 = arith.constant 0 : index
    %c0_26 = arith.constant 0 : index
    %24 = vector.load %arg4[%c2, %c0_25, %c0_26] : memref<3x128x128xbf16, #tpu.memory_space<vmem>>, vector<1x128x128xbf16>
    %25 = vector.shape_cast %24 : vector<1x128x128xbf16> to vector<128x128xbf16>
    %cst_27 = arith.constant dense<0.000000e+00> : vector<16x128xf32>
    %26 = tpu.matmul %23, %25, %cst_27 {dimension_numbers = #tpu.dot_dimension_numbers<[1], [0], [0], [1], [0, 0, 1, 1], [], []>} : vector<16x128xbf16>, vector<128x128xbf16>, vector<16x128xf32> -> vector<16x128xf32>
    %27 = arith.addf %22, %26 : vector<16x128xf32>
    %c0_28 = arith.constant 0 : index
    %c0_29 = arith.constant 0 : index
    %28 = vector.load %arg5[%c0_28, %c0_29] : memref<1x128xf32, #tpu.memory_space<vmem>>, vector<1x128xf32>
    %29 = vector.broadcast %28 : vector<1x128xf32> to vector<16x128xf32>
    %30 = arith.addf %27, %29 : vector<16x128xf32>
    %cst_30 = arith.constant 0.000000e+00 : f32
    %31 = vector.broadcast %cst_30 : f32 to vector<16x128xf32>
    %32 = arith.maximumf %30, %31 : vector<16x128xf32>
    %c0_31 = arith.constant 0 : index
    %c0_32 = arith.constant 0 : index
    %33 = vector.load %arg6[%c0_31, %c0_32] : memref<1x128xf32, #tpu.memory_space<vmem>>, vector<1x128xf32>
    %34 = vector.broadcast %33 : vector<1x128xf32> to vector<16x128xf32>
    %35 = arith.mulf %32, %34 : vector<16x128xf32>
    %cst_33 = arith.constant dense<0.000000e+00> : vector<16xf32>
    %36 = vector.multi_reduction <add>, %35, %cst_33 [1] : vector<16x128xf32> to vector<16xf32>
    %37 = vector.shape_cast %36 : vector<16xf32> to vector<16x1xf32>
    %c0_34 = arith.constant 0 : index
    %c0_35 = arith.constant 0 : index
    %38 = vector.load %arg7[%c0_34, %c0_35] : memref<1x1xf32, #tpu.memory_space<vmem>>, vector<1x1xf32>
    %39 = vector.broadcast %38 : vector<1x1xf32> to vector<16x1xf32>
    %40 = arith.addf %37, %39 : vector<16x1xf32>
    %41 = arith.negf %40 : vector<16x1xf32>
    %42 = math.exp %41 : vector<16x1xf32>
    %cst_36 = arith.constant 1.000000e+00 : f32
    %43 = vector.broadcast %cst_36 : f32 to vector<16x1xf32>
    %44 = arith.addf %43, %42 : vector<16x1xf32>
    %45 = arith.divf %43, %44 : vector<16x1xf32>
    %cst_37 = arith.constant 1.000000e+00 : f32
    %46 = vector.broadcast %cst_37 : f32 to vector<16x1xf32>
    %47 = arith.mulf %45, %46 : vector<16x1xf32>
    %cst_38 = arith.constant 0.000000e+00 : f32
    %48 = vector.broadcast %cst_38 : f32 to vector<16x1xf32>
    %49 = arith.subf %47, %48 : vector<16x1xf32>
    %cst_39 = arith.constant 0.000000e+00 : f32
    %50 = vector.broadcast %cst_39 : f32 to vector<16x1xf32>
    %51 = arith.maximumf %49, %50 : vector<16x1xf32>
    %c0_40 = arith.constant 0 : index
    %c0_41 = arith.constant 0 : index
    %c0_42 = arith.constant 0 : index
    %52 = vector.load %arg8[%c0_40, %c0_41, %c0_42] : memref<1x16x1xf32, #tpu.memory_space<vmem>>, vector<1x16x1xf32>
    %53 = vector.shape_cast %52 : vector<1x16x1xf32> to vector<16x1xf32>
    %54 = arith.mulf %51, %53 : vector<16x1xf32>
    %c0_43 = arith.constant 0 : index
    %c0_44 = arith.constant 0 : index
    %c0_45 = arith.constant 0 : index
    %55 = vector.load %arg9[%c0_43, %c0_44, %c0_45] : memref<1x16x1xf32, #tpu.memory_space<vmem>>, vector<1x16x1xf32>
    %56 = vector.shape_cast %55 : vector<1x16x1xf32> to vector<16x1xf32>
    %57 = vector.shape_cast %54 : vector<16x1xf32> to vector<1x16x1xf32>
    tpu.vector_store %arg9[%c0_43, %c0_44, %c0_45], %57 {strides = array<i32>} : memref<1x16x1xf32, #tpu.memory_space<vmem>>, vector<1x16x1xf32>,
    return
  }
  func.func @transform_0(%arg0: i32, %arg1: i32) -> (i32, i32, i32) {
    %c0_i32 = arith.constant 0 : i32
    %c0_i32_0 = arith.constant 0 : i32
    return %arg0, %arg1, %c0_i32 : i32, i32, i32
  }
  func.func @transform_1(%arg0: i32, %arg1: i32) -> (i32, i32, i32, i32) {
    %c0_i32 = arith.constant 0 : i32
    %c0_i32_0 = arith.constant 0 : i32
    %c0_i32_1 = arith.constant 0 : i32
    return %arg0, %arg1, %c0_i32, %c0_i32_0 : i32, i32, i32, i32
  }
  func.func @transform_2(%arg0: i32, %arg1: i32) -> (i32, i32, i32) {
    %c0_i32 = arith.constant 0 : i32
    %c0_i32_0 = arith.constant 0 : i32
    %c0_i32_1 = arith.constant 0 : i32
    %c0_i32_2 = arith.constant 0 : i32
    return %c0_i32, %c0_i32_0, %c0_i32_1 : i32, i32, i32
  }
  func.func @transform_3(%arg0: i32, %arg1: i32) -> (i32, i32) {
    %c0_i32 = arith.constant 0 : i32
    %c0_i32_0 = arith.constant 0 : i32
    %c0_i32_1 = arith.constant 0 : i32
    return %c0_i32, %c0_i32_0 : i32, i32
  }
  func.func @transform_4(%arg0: i32, %arg1: i32) -> (i32, i32) {
    %c0_i32 = arith.constant 0 : i32
    %c0_i32_0 = arith.constant 0 : i32
    %c0_i32_1 = arith.constant 0 : i32
    return %c0_i32, %c0_i32_0 : i32, i32
  }
  func.func @transform_5(%arg0: i32, %arg1: i32) -> (i32, i32) {
    %c0_i32 = arith.constant 0 : i32
    %c0_i32_0 = arith.constant 0 : i32
    %c0_i32_1 = arith.constant 0 : i32
    return %c0_i32, %c0_i32_0 : i32, i32
  }
  func.func @transform_6(%arg0: i32, %arg1: i32) -> (i32, i32, i32) {
    %c0_i32 = arith.constant 0 : i32
    %c0_i32_0 = arith.constant 0 : i32
    return %arg0, %arg1, %c0_i32 : i32, i32, i32
  }
  func.func @transform_7(%arg0: i32, %arg1: i32) -> (i32, i32, i32) {
    %c0_i32 = arith.constant 0 : i32
    %c0_i32_0 = arith.constant 0 : i32
    return %arg0, %arg1, %c0_i32 : i32, i32, i32
  }
}

</mosaic_0001>

<llo_original>
// kernel: tpu_custom_call.1
$region0: #{tpu_custom_call.1}
  #allocation0 [shape = 'u32[]', space=smem, size = 0x4, offset = 0x4, fixed_abs, tag = 'smem constant byte address 0x4 - core index']
  #allocation1 [shape = 'u32[144,128]{1,0:T(1,128)}', space=vmem, size = 0x12000, scoped, tag = 'internal scratch']
  #allocation2 [shape = 'bf16[33,128]{1,0:T(8,128)(2,1)}', space=vmem, size = 0x2800, scoped, tag = 'scratch operand']
  #allocation3 [shape = 'f32[1,1]{1,0:T(1,128)S(1)}', space=vmem, size = 0x200, scoped, tag = 'scoped memory for tpu_custom_call.1']
  %s0 = inlined_call_operand.vmem [shape: f32[2,16,128], index: 0, kind: input, shape index: {}]
  %s1 = inlined_call_operand.vmem [shape: f32[2,1,2,128], index: 1, kind: input, shape index: {}]
  %s2 = inlined_call_operand.hbm [shape: bf16[3,128,128], index: 2, kind: input, shape index: {}]
  %s3 = inlined_call_operand.vmem [shape: f32[1,128], index: 3, kind: input, shape index: {}]
  %s4 = inlined_call_operand.vmem [shape: f32[1,128], index: 4, kind: input, shape index: {}]
  %s5 = inlined_call_operand.<no memory space> [shape: f32[1,1], index: 5, kind: input, shape index: {}]
  %s6 = inlined_call_operand.vmem [shape: f32[2,16,1], index: 6, kind: input, shape index: {}]
  %s7 = inlined_call_operand.vmem [shape: f32[2,16,1], index: 7, kind: output, shape index: {}]
  %s8 = sld [smem:[#allocation0]]
  $region65: #{tpu_custom_call.1} parent=0
    _
  %s10 = ssub.s32 1, %s8
  %s11 = scalar_select 0, %s10, %s8
  %v12 = vstv %s5
  %13 = vst [vmem:[#allocation3] sm:$0x1] %v12
  $region1: #{tpu_custom_call.1} parent=0
    #allocation4 [shape = 'u8[98304]{0}', space=vmem, size = 0x18000, scoped, tag = 'input window, operand 2, single buffered']
    #allocation5 [shape = 's32[2]{0}', space=sflag, size = 0x8, scoped, tag = 'scoped memory for tpu_custom_call.1']
    %14 = vsyncpa [#allocation5], 0
    loop: start=0, step=1, limit=4
    $region2: #{tpu_custom_call.1} parent=1 // loop_pre_header
      _
    $region3: #{tpu_custom_call.1} parent=1 // loop_header
      %s16 = sphi 0, %s20
      %p17 = scmp.ge.s32.totalorder %s16, 4
      %s23 = sphi 0, %s35
      %s24 = sphi 0, %s31
      %s25 = sphi 0, %s23
      %s26 = sphi 0, %s24
      %s27 = sphi 0, %s25
      %s28 = sphi 0, %s26
      %s40 = sphi 0, %s42
      %s43 = sphi 0, %s40
      %s44 = sphi 0, %s43
      %s60 = sphi 0, %s44
      %s68 = sphi 0, %s70
      %s71 = sphi 0, %s68
      %s72 = sphi 0, %s71
      %s88 = sphi 0, %s72
      %s92 = sphi 0, %s92
      %s94 = sphi 0, %s92
      %s95 = sphi 0, %s94
      %s109 = sphi 0, %s95
      %s113 = sphi 0, %s113
      %s115 = sphi 0, %s113
      %s116 = sphi 0, %s115
      %s130 = sphi 0, %s116
      %s134 = sphi 0, %s134
      %s136 = sphi 0, %s134
      %s137 = sphi 0, %s136
      %s151 = sphi 0, %s137
      %s155 = sphi 0, %s155
      %s157 = sphi 0, %s155
      %s158 = sphi 0, %s157
      %s172 = sphi 0, %s158
      %s180 = sphi 0, %s182
      %s183 = sphi 0, %s180
      %s184 = sphi 0, %s183
      %s200 = sphi 0, %s184
      %s208 = sphi 0, %s210
      %s211 = sphi 0, %s208
      %s212 = sphi 0, %s211
      %s228 = sphi 0, %s212
    $region4: #{tpu_custom_call.1} parent=1 // loop_header_branch
      %19 = sbr.rel (%p17) target = $region8
    $region5: #{tpu_custom_call.1} parent=1 // loop_body
      %s21 = ssub.s32 %s16, 1
      %s22 = ssub.s32 %s16, 2
      %s29 = sadd.s32 1, %s24
      %p30 = scmp.ge.s32.totalorder %s29, 1
      %s31 = scalar_select %p30, 0, %s29
      %s32 = sadd.s32 1, %s23
      %s33 = scalar_select %p30, %s32, %s23
      %p34 = scmp.ge.s32.totalorder %s33, 2
      %s35 = scalar_select %p34, 0, %s33
      %s36 = ssub.s32 %s23, %s35
      %s37 = ssub.s32 %s24, %s31
      %s38 = sor.u32 %s36, %s37
      %p39 = scmp.eq.s32.totalorder %s38, 0
      %s41 = sadd.s32 %s40, 1
      %s42 = scalar_select %p39, %s40, %s41
      %p45 = pneg %p39
      %p46 = scmp.eq.s32.totalorder %s16, 1
      %p47 = por %p45, %p46
      %p48 = scmp.ne.s32.totalorder %s40, %s43
      %p49 = scmp.eq.s32.totalorder %s16, 0
      %p50 = por %p48, %p49
      %p51 = scmp.ne.s32.totalorder %s40, %s43
      %p52 = scmp.eq.s32.totalorder %s21, 1
      %p53 = por %p51, %p52
      %p54 = scmp.ne.s32.totalorder %s43, %s44
      %p55 = scmp.eq.s32.totalorder %s21, 0
      %p56 = por %p54, %p55
      %p57 = scmp.ne.s32.totalorder %s43, %s44
      %p58 = scmp.eq.s32.totalorder %s22, 1
      %p59 = por %p57, %p58
      %p61 = scmp.ne.s32.totalorder %s44, %s60
      %p62 = scmp.eq.s32.totalorder %s22, 0
      %p63 = por %p61, %p62
      %s64 = ssub.s32 %s23, %s35
      %s65 = ssub.s32 %s24, %s31
      %s66 = sor.u32 %s64, %s65
      %p67 = scmp.eq.s32.totalorder %s66, 0
      %s69 = sadd.s32 %s68, 1
      %s70 = scalar_select %p67, %s68, %s69
      %p73 = pneg %p67
      %p74 = scmp.eq.s32.totalorder %s16, 1
      %p75 = por %p73, %p74
      %p76 = scmp.ne.s32.totalorder %s68, %s71
      %p77 = scmp.eq.s32.totalorder %s16, 0
      %p78 = por %p76, %p77
      %p79 = scmp.ne.s32.totalorder %s68, %s71
      %p80 = scmp.eq.s32.totalorder %s21, 1
      %p81 = por %p79, %p80
      %p82 = scmp.ne.s32.totalorder %s71, %s72
      %p83 = scmp.eq.s32.totalorder %s21, 0
      %p84 = por %p82, %p83
      %p85 = scmp.ne.s32.totalorder %s71, %s72
      %p86 = scmp.eq.s32.totalorder %s22, 1
      %p87 = por %p85, %p86
      %p89 = scmp.ne.s32.totalorder %s72, %s88
      %p90 = scmp.eq.s32.totalorder %s22, 0
      %p91 = por %p89, %p90
      %s93 = sadd.s32 %s92, 1
      %p96 = scmp.eq.s32.totalorder %s16, 1
      %p97 = scmp.ne.s32.totalorder %s92, %s94
      %p98 = scmp.eq.s32.totalorder %s16, 0
      %p99 = por %p97, %p98
      %p100 = scmp.ne.s32.totalorder %s92, %s94
      %p101 = scmp.eq.s32.totalorder %s21, 1
      %p102 = por %p100, %p101
      %p103 = scmp.ne.s32.totalorder %s94, %s95
      %p104 = scmp.eq.s32.totalorder %s21, 0
      %p105 = por %p103, %p104
      %p106 = scmp.ne.s32.totalorder %s94, %s95
      %p107 = scmp.eq.s32.totalorder %s22, 1
      %p108 = por %p106, %p107
      %p110 = scmp.ne.s32.totalorder %s95, %s109
      %p111 = scmp.eq.s32.totalorder %s22, 0
      %p112 = por %p110, %p111
      %s114 = sadd.s32 %s113, 1
      %p117 = scmp.eq.s32.totalorder %s16, 1
      %p118 = scmp.ne.s32.totalorder %s113, %s115
      %p119 = scmp.eq.s32.totalorder %s16, 0
      %p120 = por %p118, %p119
      %p121 = scmp.ne.s32.totalorder %s113, %s115
      %p122 = scmp.eq.s32.totalorder %s21, 1
      %p123 = por %p121, %p122
      %p124 = scmp.ne.s32.totalorder %s115, %s116
      %p125 = scmp.eq.s32.totalorder %s21, 0
      %p126 = por %p124, %p125
      %p127 = scmp.ne.s32.totalorder %s115, %s116
      %p128 = scmp.eq.s32.totalorder %s22, 1
      %p129 = por %p127, %p128
      %p131 = scmp.ne.s32.totalorder %s116, %s130
      %p132 = scmp.eq.s32.totalorder %s22, 0
      %p133 = por %p131, %p132
      %s135 = sadd.s32 %s134, 1
      %p138 = scmp.eq.s32.totalorder %s16, 1
      %p139 = scmp.ne.s32.totalorder %s134, %s136
      %p140 = scmp.eq.s32.totalorder %s16, 0
      %p141 = por %p139, %p140
      %p142 = scmp.ne.s32.totalorder %s134, %s136
      %p143 = scmp.eq.s32.totalorder %s21, 1
      %p144 = por %p142, %p143
      %p145 = scmp.ne.s32.totalorder %s136, %s137
      %p146 = scmp.eq.s32.totalorder %s21, 0
      %p147 = por %p145, %p146
      %p148 = scmp.ne.s32.totalorder %s136, %s137
      %p149 = scmp.eq.s32.totalorder %s22, 1
      %p150 = por %p148, %p149
      %p152 = scmp.ne.s32.totalorder %s137, %s151
      %p153 = scmp.eq.s32.totalorder %s22, 0
      %p154 = por %p152, %p153
      %s156 = sadd.s32 %s155, 1
      %p159 = scmp.eq.s32.totalorder %s16, 1
      %p160 = scmp.ne.s32.totalorder %s155, %s157
      %p161 = scmp.eq.s32.totalorder %s16, 0
      %p162 = por %p160, %p161
      %p163 = scmp.ne.s32.totalorder %s155, %s157
      %p164 = scmp.eq.s32.totalorder %s21, 1
      %p165 = por %p163, %p164
      %p166 = scmp.ne.s32.totalorder %s157, %s158
      %p167 = scmp.eq.s32.totalorder %s21, 0
      %p168 = por %p166, %p167
      %p169 = scmp.ne.s32.totalorder %s157, %s158
      %p170 = scmp.eq.s32.totalorder %s22, 1
      %p171 = por %p169, %p170
      %p173 = scmp.ne.s32.totalorder %s158, %s172
      %p174 = scmp.eq.s32.totalorder %s22, 0
      %p175 = por %p173, %p174
      %s176 = ssub.s32 %s23, %s35
      %s177 = ssub.s32 %s24, %s31
      %s178 = sor.u32 %s176, %s177
      %p179 = scmp.eq.s32.totalorder %s178, 0
      %s181 = sadd.s32 %s180, 1
      %s182 = scalar_select %p179, %s180, %s181
      %p185 = pneg %p179
      %p186 = scmp.eq.s32.totalorder %s16, 1
      %p187 = por %p185, %p186
      %p188 = scmp.ne.s32.totalorder %s180, %s183
      %p189 = scmp.eq.s32.totalorder %s16, 0
      %p190 = por %p188, %p189
      %p191 = scmp.ne.s32.totalorder %s180, %s183
      %p192 = scmp.eq.s32.totalorder %s21, 1
      %p193 = por %p191, %p192
      %p194 = scmp.ne.s32.totalorder %s183, %s184
      %p195 = scmp.eq.s32.totalorder %s21, 0
      %p196 = por %p194, %p195
      %p197 = scmp.ne.s32.totalorder %s183, %s184
      %p198 = scmp.eq.s32.totalorder %s22, 1
      %p199 = por %p197, %p198
      %p201 = scmp.ne.s32.totalorder %s184, %s200
      %p202 = scmp.eq.s32.totalorder %s22, 0
      %p203 = por %p201, %p202
      %s204 = ssub.s32 %s23, %s35
      %s205 = ssub.s32 %s24, %s31
      %s206 = sor.u32 %s204, %s205
      %p207 = scmp.eq.s32.totalorder %s206, 0
      %s209 = sadd.s32 %s208, 1
      %s210 = scalar_select %p207, %s208, %s209
      %p213 = pneg %p207
      %p214 = scmp.eq.s32.totalorder %s16, 1
      %p215 = por %p213, %p214
      %p216 = scmp.ne.s32.totalorder %s208, %s211
      %p217 = scmp.eq.s32.totalorder %s16, 0
      %p218 = por %p216, %p217
      %p219 = scmp.ne.s32.totalorder %s208, %s211
      %p220 = scmp.eq.s32.totalorder %s21, 1
      %p221 = por %p219, %p220
      %p222 = scmp.ne.s32.totalorder %s211, %s212
      %p223 = scmp.eq.s32.totalorder %s21, 0
      %p224 = por %p222, %p223
      %p225 = scmp.ne.s32.totalorder %s211, %s212
      %p226 = scmp.eq.s32.totalorder %s22, 1
      %p227 = por %p225, %p226
      %p229 = scmp.ne.s32.totalorder %s212, %s228
      %p230 = scmp.eq.s32.totalorder %s22, 0
      %p231 = por %p229, %p230
      %p232 = scmp.le.s32.totalorder 1, %s16
      %p233 = scmp.lt.s32.totalorder %s16, 3
      %p234 = pnand %p232, %p233
      %p235 = pneg %p234
      // Predicated region
      $region9: #{tpu_custom_call.1} parent=5 // pred_check
        _
      $region10: #{tpu_custom_call.1} parent=5 // pred_check_branch
        %237 = sbr.rel (%p234) target = $region12
      $region11: #{tpu_custom_call.1} parent=5 // pred_region
        %s238 = ssub.s32 %s16, 1
        // Predicated region
        $region13: #{tpu_custom_call.1} parent=11 // pred_check
          %p239 = pneg %p105
        $region14: #{tpu_custom_call.1} parent=11 // pred_check_branch
          %241 = sbr.rel (%p239) target = $region16
        $region15: #{tpu_custom_call.1} parent=11 // pred_region
          %s243 = ssub.s32 3072, 3072
          %244 = vsyncadd [#allocation5], %s243
          %s245 = sshll.u32 [#allocation4], 4
          %s246 = int_to_ptr.vmem [resolvable:$true] %s245
          %251 = dma.hbm_to_vmem [thread:$0]  %s2, 3072, %s246, [#allocation5], 64, 64, 4
        $region16: #{tpu_custom_call.1} parent=11 // pred_fallthru
          _
        // Predicated region
        $region17: #{tpu_custom_call.1} parent=11 // pred_check
          %p252 = pneg %p126
        $region18: #{tpu_custom_call.1} parent=11 // pred_check_branch
          %254 = sbr.rel (%p252) target = $region20
        $region19: #{tpu_custom_call.1} parent=11 // pred_region
          _
        $region20: #{tpu_custom_call.1} parent=11 // pred_fallthru
          _
        // Predicated region
        $region21: #{tpu_custom_call.1} parent=11 // pred_check
          %p255 = pneg %p147
        $region22: #{tpu_custom_call.1} parent=11 // pred_check_branch
          %257 = sbr.rel (%p255) target = $region24
        $region23: #{tpu_custom_call.1} parent=11 // pred_region
          _
        $region24: #{tpu_custom_call.1} parent=11 // pred_fallthru
          _
        // Predicated region
        $region25: #{tpu_custom_call.1} parent=11 // pred_check
          %p258 = pneg %p168
        $region26: #{tpu_custom_call.1} parent=11 // pred_check_branch
          %260 = sbr.rel (%p258) target = $region28
        $region27: #{tpu_custom_call.1} parent=11 // pred_region
          _
        $region28: #{tpu_custom_call.1} parent=11 // pred_fallthru
          _
      $region12: #{tpu_custom_call.1} parent=5 // pred_fallthru
        _
      %p261 = scmp.lt.s32.totalorder %s16, 2
      // Predicated region
      $region29: #{tpu_custom_call.1} parent=5 // pred_check
        %p262 = pneg %p261
      $region30: #{tpu_custom_call.1} parent=5 // pred_check_branch
        %264 = sbr.rel (%p262) target = $region32
      $region31: #{tpu_custom_call.1} parent=5 // pred_region
        // Predicated region
        $region33: #{tpu_custom_call.1} parent=31 // pred_check
          %p265 = pneg %p50
        $region34: #{tpu_custom_call.1} parent=31 // pred_check_branch
          %267 = sbr.rel (%p265) target = $region36
        $region35: #{tpu_custom_call.1} parent=31 // pred_region
          %s268 = smul.u32 2, %s24
          %p269 = scmp.lt.s32.totalorder %s23, 1
          %s270 = scalar_select %p269, %s23, 1
          %p271 = scmp.lt.s32.totalorder %s268, 1
          %s272 = scalar_select %p271, %s268, 1
          %s273 = smul.addr %s270, 2
          %s274 = sadd.s32 %s272, %s273
          %s275 = smul.addr %s274, 8
          %s276 = scalar_lea.vmem %s0, %s275
          %s277 = smul.u32 2, %s24
        $region36: #{tpu_custom_call.1} parent=31 // pred_fallthru
          _
        // Predicated region
        $region37: #{tpu_custom_call.1} parent=31 // pred_check
          %p278 = pneg %p78
        $region38: #{tpu_custom_call.1} parent=31 // pred_check_branch
          %280 = sbr.rel (%p278) target = $region40
        $region39: #{tpu_custom_call.1} parent=31 // pred_region
          %p281 = scmp.lt.s32.totalorder %s23, 1
          %s282 = scalar_select %p281, %s23, 1
          %p283 = scmp.lt.s32.totalorder %s24, 0
          %s284 = scalar_select %p283, %s24, 0
          %s285 = sadd.s32 %s284, %s282
          %s286 = smul.addr %s285, 2
          %s287 = scalar_lea.vmem %s1, %s286
        $region40: #{tpu_custom_call.1} parent=31 // pred_fallthru
          _
        // Predicated region
        $region41: #{tpu_custom_call.1} parent=31 // pred_check
          %p288 = pneg %p190
        $region42: #{tpu_custom_call.1} parent=31 // pred_check_branch
          %290 = sbr.rel (%p288) target = $region44
        $region43: #{tpu_custom_call.1} parent=31 // pred_region
          %s291 = smul.u32 2, %s24
          %p292 = scmp.lt.s32.totalorder %s23, 1
          %s293 = scalar_select %p292, %s23, 1
          %p294 = scmp.lt.s32.totalorder %s291, 1
          %s295 = scalar_select %p294, %s291, 1
          %s296 = smul.addr %s293, 2
          %s297 = sadd.s32 %s295, %s296
          %s298 = smul.addr %s297, 8
          %s299 = scalar_lea.vmem %s6, %s298
          %s300 = smul.u32 2, %s24
        $region44: #{tpu_custom_call.1} parent=31 // pred_fallthru
          _
      $region32: #{tpu_custom_call.1} parent=5 // pred_fallthru
        _
      %p301 = scmp.le.s32.totalorder 1, %s16
      %p302 = scmp.lt.s32.totalorder %s16, 3
      %p303 = pnand %p301, %p302
      %p304 = pneg %p303
      // Predicated region
      $region45: #{tpu_custom_call.1} parent=5 // pred_check
        _
      $region46: #{tpu_custom_call.1} parent=5 // pred_check_branch
        %306 = sbr.rel (%p303) target = $region48
      $region47: #{tpu_custom_call.1} parent=5 // pred_region
        %s307 = ssub.s32 %s16, 1
        // Predicated region
        $region49: #{tpu_custom_call.1} parent=47 // pred_check
          %p308 = pneg %p105
        $region50: #{tpu_custom_call.1} parent=47 // pred_check_branch
          %310 = sbr.rel (%p308) target = $region52
        $region51: #{tpu_custom_call.1} parent=47 // pred_region
          %311 = dma.done [#allocation5], 3072
        $region52: #{tpu_custom_call.1} parent=47 // pred_fallthru
          _
        %s312 = smul.u32 2, %s26
        %p313 = scmp.lt.s32.totalorder %s25, 1
        %s314 = scalar_select %p313, %s25, 1
        %p315 = scmp.lt.s32.totalorder %s312, 1
        %s316 = scalar_select %p315, %s312, 1
        %s317 = smul.addr %s314, 2
        %s318 = sadd.s32 %s316, %s317
        %s319 = smul.addr %s318, 8
        %s320 = scalar_lea.vmem %s0, %s319
        %p321 = pneg %p56
        %p322 = pneg %p53
        %p323 = scmp.lt.s32.totalorder %s25, 1
        %s324 = scalar_select %p323, %s25, 1
        %p325 = scmp.lt.s32.totalorder %s26, 0
        %s326 = scalar_select %p325, %s26, 0
        %s327 = sadd.s32 %s326, %s324
        %s328 = smul.addr %s327, 2
        %s329 = scalar_lea.vmem %s1, %s328
        %p330 = pneg %p84
        %p331 = pneg %p81
        %p332 = pneg %p105
        %p333 = pneg %p102
        %p334 = pneg %p126
        %p335 = pneg %p123
        %p336 = pneg %p147
        %p337 = pneg %p144
        %p338 = pneg %p168
        %p339 = pneg %p165
        %s340 = smul.u32 2, %s26
        %p341 = scmp.lt.s32.totalorder %s25, 1
        %s342 = scalar_select %p341, %s25, 1
        %p343 = scmp.lt.s32.totalorder %s340, 1
        %s344 = scalar_select %p343, %s340, 1
        %s345 = smul.addr %s342, 2
        %s346 = sadd.s32 %s344, %s345
        %s347 = smul.addr %s346, 8
        %s348 = scalar_lea.vmem %s6, %s347
        %p349 = pneg %p196
        %p350 = pneg %p193
        %p351 = pneg %p224
        %p352 = pneg %p221
        %s353 = smul.u32 2, %s26
        %p354 = scmp.lt.s32.totalorder %s25, 1
        %s355 = scalar_select %p354, %s25, 1
        %p356 = scmp.lt.s32.totalorder %s353, 1
        %s357 = scalar_select %p356, %s353, 1
        %s358 = smul.addr %s355, 2
        %s359 = sadd.s32 %s357, %s358
        %s360 = smul.addr %s359, 8
        %s361 = scalar_lea.vmem %s7, %s360
        %s362 = smul.u32 2, %s26
        %p363 = scmp.lt.s32.totalorder %s25, 1
        %s364 = scalar_select %p363, %s25, 1
        %p365 = scmp.lt.s32.totalorder %s362, 1
        %s366 = scalar_select %p365, %s362, 1
        %s367 = smul.addr %s364, 2
        %s368 = sadd.s32 %s366, %s367
        %s369 = smul.addr %s368, 8
        %s370 = scalar_lea.vmem %s0, %s369
        %s371 = smul.u32 2, %s26
        %p372 = scmp.lt.s32.totalorder %s25, 1
        %s373 = scalar_select %p372, %s25, 1
        %p374 = scmp.lt.s32.totalorder %s26, 0
        %s375 = scalar_select %p374, %s26, 0
        %s376 = sadd.s32 %s375, %s373
        %s377 = smul.addr %s376, 2
        %s378 = scalar_lea.vmem %s1, %s377
        %s379 = smul.u32 2, %s26
        %p380 = scmp.lt.s32.totalorder %s25, 1
        %s381 = scalar_select %p380, %s25, 1
        %p382 = scmp.lt.s32.totalorder %s379, 1
        %s383 = scalar_select %p382, %s379, 1
        %s384 = smul.addr %s381, 2
        %s385 = sadd.s32 %s383, %s384
        %s386 = smul.addr %s385, 8
        %s387 = scalar_lea.vmem %s6, %s386
        %s388 = smul.u32 2, %s26
        %s389 = smul.u32 2, %s26
        %p390 = scmp.lt.s32.totalorder %s25, 1
        %s391 = scalar_select %p390, %s25, 1
        %p392 = scmp.lt.s32.totalorder %s389, 1
        %s393 = scalar_select %p392, %s389, 1
        %s394 = smul.addr %s391, 2
        %s395 = sadd.s32 %s393, %s394
        %s396 = smul.addr %s395, 8
        %s397 = scalar_lea.vmem %s7, %s396
        %s398 = smul.u32 2, %s26
        %v400 = vld [vmem:[%s378] sm:$0x1]
        %v401 = vpack.c.bf16 %v400, %v400
        %v403 = vunpack.c.l.b16 %v401
        %v404 = vpack.c.b16 %v403, %v403
        %v406 = vshll.u32 %v404, 16
        %v408 = vrot.slane %v406, 5
        %vm410 = vcmask 1043459
        %vm411 = vsmask.f32 7950
        %vm412 = vmand %vm410, %vm411
        %v413 = vld [vmem:[#allocation2 + $0x4] sm:$0x8]
        %v414 = vsel %vm412, %v408, %v413
        %415 = vst [vmem:[#allocation2 + $0x4] sm:$0x8] %v414
        %v416 = vld [vmem:[%s370] sm:$0xff]
        %v417 = vld [vmem:[%s370 + $0x8] sm:$0xff]
        %v418 = vpack.c.bf16 %v417, %v416
        %v420 = vunpack.c.l.b16 %v418
        %v421 = vunpack.c.h.b16 %v418
        %v422 = vpack.c.b16 %v420, %v420
        %v423 = vpack.c.b16 %v421, %v421
        %426 = vst [vmem:[#allocation2 + $0x8] sm:$0xf] %v422
        %427 = vst [vmem:[#allocation2 + $0xc] sm:$0xf] %v423
        %v428 = vld [vmem:[%s378 + $0x1] sm:$0x1]
        %v429 = vpack.c.bf16 %v428, %v428
        %vm430 = vcmask 1040384
        %vm431 = vsmask.f32 256
        %vm432 = vmand %vm430, %vm431
        %v433 = vld [vmem:[#allocation2 + $0x10] sm:$0x1]
        %v434 = vsel %vm432, %v429, %v433
        %435 = vst [vmem:[#allocation2 + $0x10] sm:$0x1] %v434
        %v436 = vld [vmem:[#allocation2 + $0x4] sm:$0x8]
        %v437 = vld [vmem:[#allocation2 + $0x8] sm:$0xf]
        %v438 = vld [vmem:[#allocation2 + $0xc] sm:$0xf]
        %v439 = vld [vmem:[#allocation4] sm:$0xf]
        %v440 = vld [vmem:[#allocation4 + $0x4] sm:$0xf]
        %v441 = vld [vmem:[#allocation4 + $0x8] sm:$0xf]
        %v442 = vld [vmem:[#allocation4 + $0xc] sm:$0xf]
        %v443 = vld [vmem:[#allocation4 + $0x10] sm:$0xf]
        %v444 = vld [vmem:[#allocation4 + $0x14] sm:$0xf]
        %v445 = vld [vmem:[#allocation4 + $0x18] sm:$0xf]
        %v446 = vld [vmem:[#allocation4 + $0x1c] sm:$0xf]
        %v447 = vld [vmem:[#allocation4 + $0x20] sm:$0xf]
        %v448 = vld [vmem:[#allocation4 + $0x24] sm:$0xf]
        %v449 = vld [vmem:[#allocation4 + $0x28] sm:$0xf]
        %v450 = vld [vmem:[#allocation4 + $0x2c] sm:$0xf]
        %v451 = vld [vmem:[#allocation4 + $0x30] sm:$0xf]
        %v452 = vld [vmem:[#allocation4 + $0x34] sm:$0xf]
        %v453 = vld [vmem:[#allocation4 + $0x38] sm:$0xf]
        %v454 = vld [vmem:[#allocation4 + $0x3c] sm:$0xf]
        %s455 = scalar_lea.vmem [#allocation4], 64
        %v456 = vld [vmem:[%s455] sm:$0xf]
        %v457 = vld [vmem:[%s455 + $0x4] sm:$0xf]
        %v458 = vld [vmem:[%s455 + $0x8] sm:$0xf]
        %v459 = vld [vmem:[%s455 + $0xc] sm:$0xf]
        %v460 = vld [vmem:[%s455 + $0x10] sm:$0xf]
        %v461 = vld [vmem:[%s455 + $0x14] sm:$0xf]
        %v462 = vld [vmem:[%s455 + $0x18] sm:$0xf]
        %v463 = vld [vmem:[%s455 + $0x1c] sm:$0xf]
        %v464 = vld [vmem:[%s455 + $0x20] sm:$0xf]
        %v465 = vld [vmem:[%s455 + $0x24] sm:$0xf]
        %v466 = vld [vmem:[%s455 + $0x28] sm:$0xf]
        %v467 = vld [vmem:[%s455 + $0x2c] sm:$0xf]
        %v468 = vld [vmem:[%s455 + $0x30] sm:$0xf]
        %v469 = vld [vmem:[%s455 + $0x34] sm:$0xf]
        %v470 = vld [vmem:[%s455 + $0x38] sm:$0xf]
        %v471 = vld [vmem:[%s455 + $0x3c] sm:$0xf]
        %v474 = vunpack.c.l.b16 %v437
        %v475 = vunpack.c.l.b16 %v438
        %v476 = vpack.c.b16 %v475, %v474
        %v494 = vunpack.c.l.b16 %v456
        %v495 = vunpack.c.l.b16 %v457
        %v496 = vunpack.c.l.b16 %v458
        %v497 = vunpack.c.l.b16 %v459
        %v498 = vunpack.c.l.b16 %v460
        %v499 = vunpack.c.l.b16 %v461
        %v500 = vunpack.c.l.b16 %v462
        %v501 = vunpack.c.l.b16 %v463
        %v502 = vunpack.c.l.b16 %v464
        %v503 = vunpack.c.l.b16 %v465
        %v504 = vunpack.c.l.b16 %v466
        %v505 = vunpack.c.l.b16 %v467
        %v506 = vunpack.c.l.b16 %v468
        %v507 = vunpack.c.l.b16 %v469
        %v508 = vunpack.c.l.b16 %v470
        %v509 = vunpack.c.l.b16 %v471
        %v510 = vpack.c.b16 %v495, %v494
        %v511 = vpack.c.b16 %v497, %v496
        %v512 = vpack.c.b16 %v499, %v498
        %v513 = vpack.c.b16 %v501, %v500
        %v514 = vpack.c.b16 %v503, %v502
        %v515 = vpack.c.b16 %v505, %v504
        %v516 = vpack.c.b16 %v507, %v506
        %v517 = vpack.c.b16 %v509, %v508
        %526 = vmatprep.subr.bf16.mxu0 0
        %527 = vmatpush1.bf16.msra.mxu0 %v510
        %528 = vmatprep.subr.bf16.mxu0 0
        %529 = vmatpush1.bf16.msra.mxu0 %v511
        %530 = vmatprep.subr.bf16.mxu0 0
        %531 = vmatpush1.bf16.msra.mxu0 %v512
        %532 = vmatprep.subr.bf16.mxu0 0
        %533 = vmatpush1.bf16.msra.mxu0 %v513
        %534 = vmatprep.subr.bf16.mxu0 0
        %535 = vmatpush1.bf16.msra.mxu0 %v514
        %536 = vmatprep.subr.bf16.mxu0 0
        %537 = vmatpush1.bf16.msra.mxu0 %v515
        %538 = vmatprep.subr.bf16.mxu0 0
        %539 = vmatpush1.bf16.msra.mxu0 %v516
        %540 = vmatprep.subr.bf16.mxu0 0
        %541 = vmatpush1.bf16.msra.mxu0 %v517
        %542 = vmatprep.subr.bf16.mxu0 0
        %543 = vmatpush1.bf16.msra.mxu0 0
        %544 = vmatprep.subr.bf16.mxu0 0
        %545 = vmatpush1.bf16.msra.mxu0 0
        %546 = vmatprep.subr.bf16.mxu0 0
        %547 = vmatpush1.bf16.msra.mxu0 0
        %548 = vmatprep.subr.bf16.mxu0 0
        %549 = vmatpush1.bf16.msra.mxu0 0
        %550 = vmatprep.subr.bf16.mxu0 0
        %551 = vmatpush1.bf16.msra.mxu0 0
        %552 = vmatprep.subr.bf16.mxu0 0
        %553 = vmatpush1.bf16.msra.mxu0 0
        %554 = vmatprep.subr.bf16.mxu0 0
        %555 = vmatpush1.bf16.msra.mxu0 0
        %556 = vmatprep.subr.bf16.mxu0 0
        %557 = vmatpush1.bf16.msra.mxu0 0
        %558 = vmatprep.mubr.bf16.mxu0 0
        %559 = vmatmul.mubr.bf16.gmra.mrb[0].mxu0 %v476
        %v560 = vpop.f32.mrb[0].mxu0
        %v561 = vadd.f32 0.0, %v560
        %v562 = vpop.f32.mrb[0].mxu0
        %v563 = vpop.f32.mrb[0].mxu0
        %v564 = vadd.f32 0.0, %v563
        %v565 = vpop.f32.mrb[0].mxu0
        %566 = vdwg.mxu0
        %v568 = vunpack.c.l.b16 %v436
        %v569 = vpack.c.b16 %v474, %v568
        %v570 = vpack.c.b16 %v475, %v475
        %vm571 = vsmask.f32 4352
        %v573 = vshrl.u32 %v569, 16
        %v575 = vrot.slane %v573, 3
        %v576 = vshll.u32 %v569, 16
        %v578 = vrot.slane %v576, 4
        %v579 = vor.u32 %v575, %v578
        %v581 = vshrl.u32 %v570, 16
        %v583 = vrot.slane %v581, 3
        %v584 = vshll.u32 %v570, 16
        %v586 = vrot.slane %v584, 4
        %v587 = vor.u32 %v583, %v586
        %v588 = vsel %vm571, %v579, %v587
        %v606 = vunpack.c.l.b16 %v439
        %v607 = vunpack.c.l.b16 %v440
        %v608 = vunpack.c.l.b16 %v441
        %v609 = vunpack.c.l.b16 %v442
        %v610 = vunpack.c.l.b16 %v443
        %v611 = vunpack.c.l.b16 %v444
        %v612 = vunpack.c.l.b16 %v445
        %v613 = vunpack.c.l.b16 %v446
        %v614 = vunpack.c.l.b16 %v447
        %v615 = vunpack.c.l.b16 %v448
        %v616 = vunpack.c.l.b16 %v449
        %v617 = vunpack.c.l.b16 %v450
        %v618 = vunpack.c.l.b16 %v451
        %v619 = vunpack.c.l.b16 %v452
        %v620 = vunpack.c.l.b16 %v453
        %v621 = vunpack.c.l.b16 %v454
        %v622 = vpack.c.b16 %v607, %v606
        %v623 = vpack.c.b16 %v609, %v608
        %v624 = vpack.c.b16 %v611, %v610
        %v625 = vpack.c.b16 %v613, %v612
        %v626 = vpack.c.b16 %v615, %v614
        %v627 = vpack.c.b16 %v617, %v616
        %v628 = vpack.c.b16 %v619, %v618
        %v629 = vpack.c.b16 %v621, %v620
        %638 = vmatprep.subr.bf16.mxu0 0
        %639 = vmatpush1.bf16.msra.mxu0 %v622
        %640 = vmatprep.subr.bf16.mxu0 0
        %641 = vmatpush1.bf16.msra.mxu0 %v623
        %642 = vmatprep.subr.bf16.mxu0 0
        %643 = vmatpush1.bf16.msra.mxu0 %v624
        %644 = vmatprep.subr.bf16.mxu0 0
        %645 = vmatpush1.bf16.msra.mxu0 %v625
        %646 = vmatprep.subr.bf16.mxu0 0
        %647 = vmatpush1.bf16.msra.mxu0 %v626
        %648 = vmatprep.subr.bf16.mxu0 0
        %649 = vmatpush1.bf16.msra.mxu0 %v627
        %650 = vmatprep.subr.bf16.mxu0 0
        %651 = vmatpush1.bf16.msra.mxu0 %v628
        %652 = vmatprep.subr.bf16.mxu0 0
        %653 = vmatpush1.bf16.msra.mxu0 %v629
        %654 = vmatprep.subr.bf16.mxu0 0
        %655 = vmatpush1.bf16.msra.mxu0 0
        %656 = vmatprep.subr.bf16.mxu0 0
        %657 = vmatpush1.bf16.msra.mxu0 0
        %658 = vmatprep.subr.bf16.mxu0 0
        %659 = vmatpush1.bf16.msra.mxu0 0
        %660 = vmatprep.subr.bf16.mxu0 0
        %661 = vmatpush1.bf16.msra.mxu0 0
        %662 = vmatprep.subr.bf16.mxu0 0
        %663 = vmatpush1.bf16.msra.mxu0 0
        %664 = vmatprep.subr.bf16.mxu0 0
        %665 = vmatpush1.bf16.msra.mxu0 0
        %666 = vmatprep.subr.bf16.mxu0 0
        %667 = vmatpush1.bf16.msra.mxu0 0
        %668 = vmatprep.subr.bf16.mxu0 0
        %669 = vmatpush1.bf16.msra.mxu0 0
        %670 = vmatprep.mubr.bf16.mxu0 0
        %671 = vmatmul.mubr.bf16.gmra.mrb[0].mxu0 %v588
        %v672 = vpop.f32.mrb[0].mxu0
        %v673 = vadd.f32 %v561, %v672
        %v674 = vpop.f32.mrb[0].mxu0
        %v675 = vpop.f32.mrb[0].mxu0
        %v676 = vadd.f32 %v564, %v675
        %v677 = vpop.f32.mrb[0].mxu0
        %678 = vdwg.mxu0
        %v679 = vld [vmem:[#allocation2 + $0x8] sm:$0xf]
        %v680 = vld [vmem:[#allocation2 + $0xc] sm:$0xf]
        %v681 = vld [vmem:[#allocation2 + $0x10] sm:$0x1]
        %s682 = scalar_lea.vmem [#allocation4], 128
        %v683 = vld [vmem:[%s682] sm:$0xf]
        %v684 = vld [vmem:[%s682 + $0x4] sm:$0xf]
        %v685 = vld [vmem:[%s682 + $0x8] sm:$0xf]
        %v686 = vld [vmem:[%s682 + $0xc] sm:$0xf]
        %v687 = vld [vmem:[%s682 + $0x10] sm:$0xf]
        %v688 = vld [vmem:[%s682 + $0x14] sm:$0xf]
        %v689 = vld [vmem:[%s682 + $0x18] sm:$0xf]
        %v690 = vld [vmem:[%s682 + $0x1c] sm:$0xf]
        %v691 = vld [vmem:[%s682 + $0x20] sm:$0xf]
        %v692 = vld [vmem:[%s682 + $0x24] sm:$0xf]
        %v693 = vld [vmem:[%s682 + $0x28] sm:$0xf]
        %v694 = vld [vmem:[%s682 + $0x2c] sm:$0xf]
        %v695 = vld [vmem:[%s682 + $0x30] sm:$0xf]
        %v696 = vld [vmem:[%s682 + $0x34] sm:$0xf]
        %v697 = vld [vmem:[%s682 + $0x38] sm:$0xf]
        %v698 = vld [vmem:[%s682 + $0x3c] sm:$0xf]
        %v702 = vunpack.c.l.b16 %v679
        %v703 = vunpack.c.l.b16 %v680
        %v704 = vunpack.c.l.b16 %v681
        %v705 = vpack.c.b16 %v703, %v702
        %v706 = vpack.c.b16 %v704, %v704
        %vm707 = vsmask.f32 7424
        %v709 = vshrl.u32 %v705, 16
        %v711 = vshll.u32 %v705, 16
        %v713 = vrot.slane %v711, 1
        %v714 = vor.u32 %v709, %v713
        %v716 = vshll.u32 %v706, 16
        %v718 = vrot.slane %v716, 1
        %v719 = vsel %vm707, %v714, %v718
        %v737 = vunpack.c.l.b16 %v683
        %v738 = vunpack.c.l.b16 %v684
        %v739 = vunpack.c.l.b16 %v685
        %v740 = vunpack.c.l.b16 %v686
        %v741 = vunpack.c.l.b16 %v687
        %v742 = vunpack.c.l.b16 %v688
        %v743 = vunpack.c.l.b16 %v689
        %v744 = vunpack.c.l.b16 %v690
        %v745 = vunpack.c.l.b16 %v691
        %v746 = vunpack.c.l.b16 %v692
        %v747 = vunpack.c.l.b16 %v693
        %v748 = vunpack.c.l.b16 %v694
        %v749 = vunpack.c.l.b16 %v695
        %v750 = vunpack.c.l.b16 %v696
        %v751 = vunpack.c.l.b16 %v697
        %v752 = vunpack.c.l.b16 %v698
        %v753 = vpack.c.b16 %v738, %v737
        %v754 = vpack.c.b16 %v740, %v739
        %v755 = vpack.c.b16 %v742, %v741
        %v756 = vpack.c.b16 %v744, %v743
        %v757 = vpack.c.b16 %v746, %v745
        %v758 = vpack.c.b16 %v748, %v747
        %v759 = vpack.c.b16 %v750, %v749
        %v760 = vpack.c.b16 %v752, %v751
        %769 = vmatprep.subr.bf16.mxu0 0
        %770 = vmatpush1.bf16.msra.mxu0 %v753
        %771 = vmatprep.subr.bf16.mxu0 0
        %772 = vmatpush1.bf16.msra.mxu0 %v754
        %773 = vmatprep.subr.bf16.mxu0 0
        %774 = vmatpush1.bf16.msra.mxu0 %v755
        %775 = vmatprep.subr.bf16.mxu0 0
        %776 = vmatpush1.bf16.msra.mxu0 %v756
        %777 = vmatprep.subr.bf16.mxu0 0
        %778 = vmatpush1.bf16.msra.mxu0 %v757
        %779 = vmatprep.subr.bf16.mxu0 0
        %780 = vmatpush1.bf16.msra.mxu0 %v758
        %781 = vmatprep.subr.bf16.mxu0 0
        %782 = vmatpush1.bf16.msra.mxu0 %v759
        %783 = vmatprep.subr.bf16.mxu0 0
        %784 = vmatpush1.bf16.msra.mxu0 %v760
        %785 = vmatprep.subr.bf16.mxu0 0
        %786 = vmatpush1.bf16.msra.mxu0 0
        %787 = vmatprep.subr.bf16.mxu0 0
        %788 = vmatpush1.bf16.msra.mxu0 0
        %789 = vmatprep.subr.bf16.mxu0 0
        %790 = vmatpush1.bf16.msra.mxu0 0
        %791 = vmatprep.subr.bf16.mxu0 0
        %792 = vmatpush1.bf16.msra.mxu0 0
        %793 = vmatprep.subr.bf16.mxu0 0
        %794 = vmatpush1.bf16.msra.mxu0 0
        %795 = vmatprep.subr.bf16.mxu0 0
        %796 = vmatpush1.bf16.msra.mxu0 0
        %797 = vmatprep.subr.bf16.mxu0 0
        %798 = vmatpush1.bf16.msra.mxu0 0
        %799 = vmatprep.subr.bf16.mxu0 0
        %800 = vmatpush1.bf16.msra.mxu0 0
        %801 = vmatprep.mubr.bf16.mxu0 0
        %802 = vmatmul.mubr.bf16.gmra.mrb[0].mxu0 %v719
        %v803 = vpop.f32.mrb[0].mxu0
        %v804 = vadd.f32 0.0, %v803
        %v805 = vpop.f32.mrb[0].mxu0
        %v806 = vpop.f32.mrb[0].mxu0
        %v807 = vadd.f32 0.0, %v806
        %v808 = vpop.f32.mrb[0].mxu0
        %809 = vdwg.mxu0
        %v810 = vadd.f32 %v673, %v804
        %v811 = vadd.f32 %v676, %v807
        %v812 = vld [vmem:[%s3] sm:$0x1]
        %v814 = vlaneseq
        %v815 = vshrl.u32 %v814, 7
        %v816 = vsub.s32 0, %v815
        %v817 = vrot.slane %v812, %v816
        %v819 = vadd.f32 %v810, %v817
        %v820 = vadd.f32 %v811, %v817
        %v821 = vmax.f32 %v819, 0.0
        %v822 = vmax.f32 %v820, 0.0
        %v823 = vld [vmem:[%s4] sm:$0x1]
        %v825 = vlaneseq
        %v826 = vshrl.u32 %v825, 7
        %v827 = vsub.s32 0, %v826
        %v828 = vrot.slane %v823, %v827
        %v830 = vmul.f32 %v821, %v828
        %v831 = vmul.f32 %v822, %v828
        %832 = vadd.xlane.f32.xlu0 %v830
        %v833 = vpop.xlane.xlu0 %832
        %834 = vadd.xlane.f32.xlu0 %v831
        %v835 = vpop.xlane.xlu0 %834
        %v836 = vld [vmem:[#allocation3] sm:$0x1]
        %v838 = vlaneseq
        %v839 = vshrl.u32 %v838, 7
        %v840 = vsub.s32 0, %v839
        %v841 = vrot.slane %v836, %v840
        %v843 = vadd.f32 %v833, %v841
        %v844 = vadd.f32 %v835, %v841
        %v845 = vxor.u32 %v843, 2147483648
        %v846 = vxor.u32 %v844, 2147483648
        %v847 = vmul.f32 %v845, 1.442695
        %v848 = vpow.pop %v847
        %v849 = vmul.f32 %v846, 1.442695
        %v850 = vpow.pop %v849
        %v851 = vadd.f32 %v848, 1.0
        %v852 = vadd.f32 %v850, 1.0
        %v853 = vrcp.pop %v851
        %v854 = vmul.f32 1.0, %v853
        %v855 = vrcp.pop %v852
        %v856 = vmul.f32 1.0, %v855
        %v857 = vmax.f32 %v854, 0.0
        %v858 = vmax.f32 %v856, 0.0
        %v859 = vld [vmem:[%s387] sm:$0xff]
        %v860 = vld [vmem:[%s387 + $0x8] sm:$0xff]
        %v861 = vmul.f32 %v857, %v859
        %v862 = vmul.f32 %v858, %v860
        %vm863 = vcmask 7168
        %864 = vst.msk [vmem:[%s397] sm:$0xff] %vm863, %v861
        %865 = vst.msk [vmem:[%s397 + $0x8] sm:$0xff] %vm863, %v862
        %s866 = smul.u32 2, %s26
        %p867 = scmp.lt.s32.totalorder %s25, 1
        %s868 = scalar_select %p867, %s25, 1
        %p869 = scmp.lt.s32.totalorder %s866, 1
        %s870 = scalar_select %p869, %s866, 1
        %s871 = smul.addr %s868, 2
        %s872 = sadd.s32 %s870, %s871
        %s873 = smul.addr %s872, 8
        %s874 = scalar_lea.vmem %s7, %s873
        // Predicated region
        $region53: #{tpu_custom_call.1} parent=47 // pred_check
          %p875 = pneg %p221
        $region54: #{tpu_custom_call.1} parent=47 // pred_check_branch
          %877 = sbr.rel (%p875) target = $region56
        $region55: #{tpu_custom_call.1} parent=47 // pred_region
          %s878 = smul.u32 2, %s26
        $region56: #{tpu_custom_call.1} parent=47 // pred_fallthru
          _
      $region48: #{tpu_custom_call.1} parent=5 // pred_fallthru
        _
      %p879 = scmp.le.s32.totalorder 2, %s16
      // Predicated region
      $region57: #{tpu_custom_call.1} parent=5 // pred_check
        %p880 = pneg %p879
      $region58: #{tpu_custom_call.1} parent=5 // pred_check_branch
        %882 = sbr.rel (%p880) target = $region60
      $region59: #{tpu_custom_call.1} parent=5 // pred_region
        %s883 = ssub.s32 %s16, 2
        // Predicated region
        $region61: #{tpu_custom_call.1} parent=59 // pred_check
          %p884 = pneg %p227
        $region62: #{tpu_custom_call.1} parent=59 // pred_check_branch
          %886 = sbr.rel (%p884) target = $region64
        $region63: #{tpu_custom_call.1} parent=59 // pred_region
          %s887 = smul.u32 2, %s28
          %p888 = scmp.lt.s32.totalorder %s27, 1
          %s889 = scalar_select %p888, %s27, 1
          %p890 = scmp.lt.s32.totalorder %s887, 1
          %s891 = scalar_select %p890, %s887, 1
          %s892 = smul.addr %s889, 2
          %s893 = sadd.s32 %s891, %s892
          %s894 = smul.addr %s893, 8
          %s895 = scalar_lea.vmem %s7, %s894
        $region64: #{tpu_custom_call.1} parent=59 // pred_fallthru
          _
      $region60: #{tpu_custom_call.1} parent=5 // pred_fallthru
        _
    $region6: #{tpu_custom_call.1} parent=1 // loop_footer
      %s20 = sadd.s32 1, %s16
    $region7: #{tpu_custom_call.1} parent=1 // loop_footer_branch
      %15 = sbr.rel target = $region3
    $region8: #{tpu_custom_call.1} parent=1 // loop_exit
      _
    %896 = vsyncpa [#allocation5], 1
    %s897 = scalar_lea.sflag [#allocation5], 1
    %898 = vsyncpa %s897, 1

</llo_original>
